<compile_context>
chip_gen: v6e
topology: v6e:2x2x1
jax: 0.10.0
libtpu: 0.0.40
codegen_flags: <defaults>
</compile_context>

<pallas_src>
import math
import functools

import jax
import jax.numpy as jnp
from jax import lax
from jax.experimental import pallas as pl
from jax.experimental.pallas import tpu as pltpu


# ---------------------------------------------------------------------------
# Path A: table resident in VMEM (single-buffered), direct dynamic row gather.
# ---------------------------------------------------------------------------
def _embed_vmem_kernel(ids_ref, emb_ref, out_ref, *,
                       tokens_per_block, vocab_size, scale):
    # ids_ref : (n_tok_pad,) int32   token ids      (SMEM, scalar prefetch)
    # emb_ref : (V, D)               table          (VMEM resident, 1 buffer)
    # out_ref : (T, D)               scaled rows    (VMEM, auto-pipelined)
    base = pl.program_id(0) * tokens_per_block
    scale_c = jnp.asarray(scale, dtype=out_ref.dtype)

    @pl.loop(0, tokens_per_block)
    def _gather(t):
        row = jnp.clip(ids_ref[base + t], 0, vocab_size - 1)
        out_ref[pl.ds(t, 1), :] = emb_ref[pl.ds(row, 1), :] * scale_c


# ---------------------------------------------------------------------------
# Path B: table stays in HBM; manual row gather, double-buffered across steps.
# ---------------------------------------------------------------------------
def _embed_gather_kernel(ids_ref, emb_hbm, out_ref, buf, sems, *,
                         tokens_per_block, vocab_size, scale, window,
                         blocks_per_core):
    # ids_ref : (n_tok_pad,) int32   token ids      (SMEM, scalar prefetch)
    # emb_hbm : (V, D)               table          (HBM, memory_space=pl.ANY)
    # out_ref : (T, D)               scaled rows    (VMEM, auto-pipelined)
    # buf     : (2, T, D)            row-gather double buffer (VMEM scratch)
    # sems    : (2 * W,)             rotating DMA semaphore pool
    T = tokens_per_block
    W = window
    c = pl.program_id(0)                   # "parallel": split across TCs (v7x)
    j = pl.program_id(1)                   # "arbitrary": sequential per core
    block = c * blocks_per_core + j
    slot = lax.rem(j, 2)

    def row_copy(blk, t, s):
        # Rebuild the identical descriptor for both start() and wait().
        row = jnp.clip(ids_ref[blk * T + t], 0, vocab_size - 1)
        return pltpu.make_async_copy(
            emb_hbm.at[pl.ds(row, 1), :],
            buf.at[s, pl.ds(t, 1), :],
            sems.at[s * W + lax.rem(t, W)],
        )

    def issue_block(blk, s):
        # Issue all T row gathers with at most W copies in flight: before
        # reusing semaphore slot (t mod W), drain the copy issued W rows ago.
        @pl.loop(0, T)
        def _issue(t):
            @pl.when(t >= W)
            def _():
                row_copy(blk, t - W, s).wait()
            row_copy(blk, t, s).start()

    def drain_block(blk, s):
        # Wait for the last W (still outstanding) copies of the block.
        @pl.loop(T - W, T)
        def _drain(t):
            row_copy(blk, t, s).wait()

    # Prime the pipeline on the first step of this core's sequential range.
    @pl.when(j == 0)
    def _prime():
        issue_block(block, slot)

    # Prefetch the next block's rows into the other buffer half; they land
    # while this block is drained / scaled and during the next step.
    @pl.when(j + 1 < blocks_per_core)
    def _prefetch():
        issue_block(block + 1, 1 - slot)

    drain_block(block, slot)
    out_ref[...] = buf[slot] * jnp.asarray(scale, dtype=out_ref.dtype)


def _vmem_capacity_bytes():
    """Physical VMEM per core (64 MiB v7x, 128 MiB v5e/v6e), with fallback."""
    try:
        return int(pltpu.get_tpu_info().vmem_capacity_bytes)
    except Exception:
        return 64 * 1024 * 1024  # conservative (v7x)


def input_embeddings(x_ids, emb_table, *, tokens_per_block=512,
                     dma_window=16, force_gather=False):
    """out[b, s, :] = emb_table[x_ids[b, s], :] * sqrt(d_model)."""
    B, S = x_ids.shape
    V, D = emb_table.shape
    scale = math.sqrt(float(D))
    out_dtype = emb_table.dtype
    itemsize = jnp.dtype(emb_table.dtype).itemsize

    n_tok = B * S
    # Token-block size: large enough to amortise the ~600-cycle per-step
    # overhead, a multiple of 8 (sublane-aligned stores), small enough that
    # small inputs still produce >= 2 blocks (both v7x TensorCores get work).
    tokens_per_block = max(8, (tokens_per_block // 8) * 8)
    if n_tok >= 2 * tokens_per_block:
        T = tokens_per_block
    else:
        T = min(tokens_per_block,
                max(8, pl.next_power_of_2(max(pl.cdiv(n_tok, 2), 1))))
    n_blocks = pl.cdiv(n_tok, T)

    vmem_cap = _vmem_capacity_bytes()
    vmem_limit = max(32 << 20, int(0.9 * vmem_cap))
    table_bytes = V * D * itemsize
    out_blk_bytes = T * D * itemsize
    # Path A VMEM: 1x resident table (Buffered(1)) + 2x double-buffered output
    # block + slack for Mosaic internal scratch.
    path_a_bytes = table_bytes + 2 * out_blk_bytes + (4 << 20)
    use_vmem_table = (not force_gather) and (path_a_bytes <= int(0.8 * vmem_cap))

    ids_flat = x_ids.reshape(n_tok).astype(jnp.int32)

    if use_vmem_table:
        n_tok_pad = n_blocks * T
        if n_tok_pad != n_tok:
            ids_flat = jnp.pad(ids_flat, (0, n_tok_pad - n_tok))  # pad with id 0
        grid_spec = pltpu.PrefetchScalarGridSpec(
            num_scalar_prefetch=1,                        # ids -> SMEM
            grid=(n_blocks,),
            in_specs=[
                # Full table resident in VMEM; constant index_map -> DMA'd once;
                # Buffered(1) avoids allocating a useless second table buffer.
                pl.BlockSpec((V, D), lambda i, ids: (0, 0),
                             pipeline_mode=pl.Buffered(1)),
            ],
            out_specs=pl.BlockSpec((T, D), lambda i, ids: (i, 0)),
        )
        out_flat = pl.pallas_call(
            functools.partial(_embed_vmem_kernel, tokens_per_block=T,
                              vocab_size=V, scale=scale),
            out_shape=jax.ShapeDtypeStruct((n_tok_pad, D), out_dtype),
            grid_spec=grid_spec,
            compiler_params=pltpu.CompilerParams(
                dimension_semantics=("parallel",),        # blocks independent
                vmem_limit_bytes=vmem_limit,
            ),
        )(ids_flat, emb_table)
    else:
        blocks_per_core = max(1, pl.cdiv(n_blocks, 2))    # even #blocks (v7x)
        n_blocks = 2 * blocks_per_core
        n_tok_pad = n_blocks * T
        if n_tok_pad != n_tok:
            ids_flat = jnp.pad(ids_flat, (0, n_tok_pad - n_tok))  # pad with id 0
        W = max(1, min(dma_window, T))
        grid_spec = pltpu.PrefetchScalarGridSpec(
            num_scalar_prefetch=1,                        # ids -> SMEM
            grid=(2, blocks_per_core),
            in_specs=[
                pl.BlockSpec(memory_space=pl.ANY),        # table stays in HBM
            ],
            out_specs=pl.BlockSpec(
                (T, D), lambda c, j, ids: (c * blocks_per_core + j, 0)),
            scratch_shapes=[
                pltpu.VMEM((2, T, D), emb_table.dtype),   # row-gather dbl buf
                pltpu.SemaphoreType.DMA((2 * W,)),        # rotating sem pool
            ],
        )
        out_flat = pl.pallas_call(
            functools.partial(_embed_gather_kernel, tokens_per_block=T,
                              vocab_size=V, scale=scale, window=W,
                              blocks_per_core=blocks_per_core),
            out_shape=jax.ShapeDtypeStruct((n_tok_pad, D), out_dtype),
            grid_spec=grid_spec,
            compiler_params=pltpu.CompilerParams(
                dimension_semantics=("parallel", "arbitrary"),
                vmem_limit_bytes=vmem_limit,
            ),
        )(ids_flat, emb_table)

    # TODO(synk): when T does not divide n_tok this trailing slice is an extra
    # full-output copy outside the kernel; pick T dividing the padded seq len
    # in real models.
    return out_flat[:n_tok].reshape(B, S, D)


if __name__ == "__main__":
    # Module hyper-params (small, synthetic)
    d_model = 32
    vocab_size = 64
    batch, seq = 2, 8

    key = jax.random.PRNGKey(0)
    k_emb, k_ids = jax.random.split(key)

    # Deterministic parameter init (nn.Embedding default ~ N(0, 1))
    emb_table = jax.random.normal(k_emb, (vocab_size, d_model), dtype=jnp.float32)
    x_ids = jax.random.randint(k_ids, (batch, seq), 0, vocab_size, dtype=jnp.int32)

    ref = emb_table[x_ids] * math.sqrt(float(d_model))

    # Path A (default for small tables): VMEM-resident table, dynamic row gather.
    out_a = jax.block_until_ready(input_embeddings(x_ids, emb_table))
    assert out_a.shape == (batch, seq, d_model), out_a.shape
    assert jnp.allclose(out_a, ref, atol=1e-5, rtol=1e-5), "VMEM-resident path mismatch"

    # Path B (large-table fallback): double-buffered manual DMA row gather.
    out_b = jax.block_until_ready(
        input_embeddings(x_ids, emb_table, force_gather=True))
    assert out_b.shape == (batch, seq, d_model), out_b.shape
    assert jnp.allclose(out_b, ref, atol=1e-5, rtol=1e-5), "HBM gather path mismatch"

    print("KERNEL_OK")
</pallas_src>

<mosaic_0001>
module attributes {stable_mosaic.version = 11 : i64} {
  func.func @_embed_vmem_kernel(%arg0: i32, %arg1: memref<16xi32, #tpu.memory_space<smem>>, %arg2: memref<64x32xf32, #tpu.memory_space<vmem>>, %arg3: memref<8x32xf32, #tpu.memory_space<vmem>>) attributes {dimension_semantics = [#tpu.dimension_semantics<parallel>], iteration_bounds = array<i64: 2>, scalar_prefetch = 1 : i64, scratch_operands = 0 : i64, tpu.core_type = #tpu.core_type<tc>, window_params = [{pipeline_mode = #tpu.pipeline_mode<synchronous>, transform_indices = @transform_0, window_bounds = array<i64: 64, 32>}, {transform_indices = @transform_1, window_bounds = array<i64: 8, 32>}]} {
    %c8_i32 = arith.constant 8 : i32
    %0 = arith.muli %arg0, %c8_i32 : i32
    %cst = arith.constant 5.65685415 : f32
    %c0_i32 = arith.constant 0 : i32
    %c8_i32_0 = arith.constant 8 : i32
    %1 = arith.addi %c0_i32, %c8_i32_0 : i32
    %c1_i32 = arith.constant 1 : i32
    scf.for %arg4 = %c0_i32 to %1 step %c1_i32  : i32 {
      %c1_i32_2 = arith.constant 1 : i32
      %2 = arith.muli %arg4, %c1_i32_2 : i32
      %c0_i32_3 = arith.constant 0 : i32
      %3 = arith.addi %c0_i32_3, %2 : i32
      %4 = arith.addi %0, %3 : i32
      %5 = arith.index_cast %4 : i32 to index
      %6 = memref.load %arg1[%5] : memref<16xi32, #tpu.memory_space<smem>>
      %c0_i32_4 = arith.constant 0 : i32
      %c63_i32 = arith.constant 63 : i32
      %7 = arith.maxsi %c0_i32_4, %6 : i32
      %8 = arith.minsi %c63_i32, %7 : i32
      %9 = arith.index_cast %8 : i32 to index
      %c0 = arith.constant 0 : index
      %10 = vector.load %arg2[%9, %c0] : memref<64x32xf32, #tpu.memory_space<vmem>>, vector<1x32xf32>
      %11 = vector.broadcast %cst : f32 to vector<1x32xf32>
      %12 = arith.mulf %10, %11 : vector<1x32xf32>
      %13 = arith.index_cast %3 : i32 to index
      %c0_5 = arith.constant 0 : index
      %14 = vector.load %arg3[%13, %c0_5] : memref<8x32xf32, #tpu.memory_space<vmem>>, vector<1x32xf32>
      tpu.vector_store %arg3[%13, %c0_5], %12 {strides = array<i32>} : memref<8x32xf32, #tpu.memory_space<vmem>>, vector<1x32xf32>,
    }
    %c8_i32_1 = arith.constant 8 : i32
    return
  }
  func.func @transform_0(%arg0: i32, %arg1: memref<16xi32, #tpu.memory_space<smem>>) -> (i32, i32) {
    %c0_i32 = arith.constant 0 : i32
    %c0_i32_0 = arith.constant 0 : i32
    %c0_i32_1 = arith.constant 0 : i32
    return %c0_i32, %c0_i32_0 : i32, i32
  }
  func.func @transform_1(%arg0: i32, %arg1: memref<16xi32, #tpu.memory_space<smem>>) -> (i32, i32) {
    %c0_i32 = arith.constant 0 : i32
    %c0_i32_0 = arith.constant 0 : i32
    return %arg0, %c0_i32 : i32, i32
  }
}

</mosaic_0001>

<llo_original>
// kernel: tpu_custom_call.1
$region0: #{tpu_custom_call.1}
  #allocation0 [shape = 'u32[]', space=smem, size = 0x4, offset = 0x4, fixed_abs, tag = 'smem constant byte address 0x4 - core index']
  #allocation1 [shape = 'u32[144,128]{1,0:T(1,128)}', space=vmem, size = 0x12000, scoped, tag = 'internal scratch']
  #allocation2 [shape = 's32[1]{0}', space=sflag, size = 0x4, scoped, tag = 'scoped memory for tpu_custom_call.1']
  #allocation3 [shape = 'u8[512]{0}', space=smem, size = 0x200, scoped, tag = 'prefetched SMEM operand 0']
  %s0 = inlined_call_operand.vmem [shape: s32[16], index: 0, kind: input, shape index: {}]
  %s1 = inlined_call_operand.vmem [shape: f32[64,32], index: 1, kind: input, shape index: {}]
  %s2 = inlined_call_operand.hbm [shape: f32[16,32], index: 2, kind: output, shape index: {}]
  %s3 = sld [smem:[#allocation0]]
  $region44: #{tpu_custom_call.1} parent=0
    _
  %s5 = ssub.s32 1, %s3
  %s6 = scalar_select 0, %s5, %s3
  %s7 = sshll.u32 %s0, 4
  %s8 = int_to_ptr.vmem [resolvable:$true] %s7
  %10 = dma.vmem_to_smem %s8, 16, [#allocation3], [#allocation2]
  %11 = dma.done [#allocation2], 16
  %12 = sfence
  $region1: #{tpu_custom_call.1} parent=0
    #allocation4 [shape = 'u8[8192]{0}', space=vmem, size = 0x2000, scoped, tag = 'output window, operand 0']
    #allocation5 [shape = 's32[2]{0}', space=sflag, size = 0x8, scoped, tag = 'scoped memory for tpu_custom_call.1']
    %13 = vsyncpa [#allocation5], 0
    %s14 = scalar_lea.sflag [#allocation5], 1
    %15 = vsyncpa %s14, 0
    loop: start=0, step=1, limit=4
    $region2: #{tpu_custom_call.1} parent=1 // loop_pre_header
      _
    $region3: #{tpu_custom_call.1} parent=1 // loop_header
      %s17 = sphi 0, %s21
      %p18 = scmp.ge.s32.totalorder %s17, 4
      %s25 = sphi 0, %s25
      %s27 = sphi 0, %s25
      %s28 = sphi 0, %s27
      %s42 = sphi 0, %s28
      %s48 = sphi 0, %s50
      %s51 = sphi 0, %s48
      %s52 = sphi 0, %s51
      %s68 = sphi 0, %s52
    $region4: #{tpu_custom_call.1} parent=1 // loop_header_branch
      %20 = sbr.rel (%p18) target = $region8
    $region5: #{tpu_custom_call.1} parent=1 // loop_body
      %s22 = ssub.s32 %s17, 1
      %s23 = ssub.s32 %s17, 2
      %s24 = sadd.s32 %s17, 1
      %s26 = sadd.s32 %s25, 1
      %p29 = scmp.eq.s32.totalorder %s17, 1
      %p30 = scmp.ne.s32.totalorder %s25, %s27
      %p31 = scmp.eq.s32.totalorder %s17, 0
      %p32 = por %p30, %p31
      %p33 = scmp.ne.s32.totalorder %s25, %s27
      %p34 = scmp.eq.s32.totalorder %s22, 1
      %p35 = por %p33, %p34
      %p36 = scmp.ne.s32.totalorder %s27, %s28
      %p37 = scmp.eq.s32.totalorder %s22, 0
      %p38 = por %p36, %p37
      %p39 = scmp.ne.s32.totalorder %s27, %s28
      %p40 = scmp.eq.s32.totalorder %s23, 1
      %p41 = por %p39, %p40
      %p43 = scmp.ne.s32.totalorder %s28, %s42
      %p44 = scmp.eq.s32.totalorder %s23, 0
      %p45 = por %p43, %p44
      %s46 = ssub.s32 %s17, %s24
      %p47 = scmp.eq.s32.totalorder %s46, 0
      %s49 = sadd.s32 %s48, 1
      %s50 = scalar_select %p47, %s48, %s49
      %p53 = pneg %p47
      %p54 = scmp.eq.s32.totalorder %s17, 1
      %p55 = por %p53, %p54
      %p56 = scmp.ne.s32.totalorder %s48, %s51
      %p57 = scmp.eq.s32.totalorder %s17, 0
      %p58 = por %p56, %p57
      %p59 = scmp.ne.s32.totalorder %s48, %s51
      %p60 = scmp.eq.s32.totalorder %s22, 1
      %p61 = por %p59, %p60
      %p62 = scmp.ne.s32.totalorder %s51, %s52
      %p63 = scmp.eq.s32.totalorder %s22, 0
      %p64 = por %p62, %p63
      %p65 = scmp.ne.s32.totalorder %s51, %s52
      %p66 = scmp.eq.s32.totalorder %s23, 1
      %p67 = por %p65, %p66
      %p69 = scmp.ne.s32.totalorder %s52, %s68
      %p70 = scmp.eq.s32.totalorder %s23, 0
      %p71 = por %p69, %p70
      %p72 = scmp.le.s32.totalorder 1, %s17
      %p73 = scmp.lt.s32.totalorder %s17, 3
      %p74 = pnand %p72, %p73
      %p75 = pneg %p74
      // Predicated region
      $region9: #{tpu_custom_call.1} parent=5 // pred_check
        _
      $region10: #{tpu_custom_call.1} parent=5 // pred_check_branch
        %77 = sbr.rel (%p74) target = $region12
      $region11: #{tpu_custom_call.1} parent=5 // pred_region
        %s78 = ssub.s32 %s17, 1
        // Predicated region
        $region13: #{tpu_custom_call.1} parent=11 // pred_check
          %p79 = pneg %p38
        $region14: #{tpu_custom_call.1} parent=11 // pred_check_branch
          %81 = sbr.rel (%p79) target = $region16
        $region15: #{tpu_custom_call.1} parent=11 // pred_region
          _
        $region16: #{tpu_custom_call.1} parent=11 // pred_fallthru
          _
      $region12: #{tpu_custom_call.1} parent=5 // pred_fallthru
        _
      %p82 = scmp.lt.s32.totalorder %s17, 2
      // Predicated region
      $region17: #{tpu_custom_call.1} parent=5 // pred_check
        %p83 = pneg %p82
      $region18: #{tpu_custom_call.1} parent=5 // pred_check_branch
        %85 = sbr.rel (%p83) target = $region20
      $region19: #{tpu_custom_call.1} parent=5 // pred_region
        _
      $region20: #{tpu_custom_call.1} parent=5 // pred_fallthru
        _
      %p86 = scmp.le.s32.totalorder 1, %s17
      %p87 = scmp.lt.s32.totalorder %s17, 3
      %p88 = pnand %p86, %p87
      %p89 = pneg %p88
      // Predicated region
      $region21: #{tpu_custom_call.1} parent=5 // pred_check
        _
      $region22: #{tpu_custom_call.1} parent=5 // pred_check_branch
        %91 = sbr.rel (%p88) target = $region24
      $region23: #{tpu_custom_call.1} parent=5 // pred_region
        %s92 = ssub.s32 %s17, 1
        %p93 = pneg %p38
        %p94 = pneg %p35
        %p95 = pneg %p64
        %p96 = pneg %p61
        %s97 = sand.u32 %s51, 1
        %s98 = scalar_lea.sflag [#allocation5], %s97
        %s99 = sand.u32 %s51, 1
        %s100 = smul.addr %s99, 8
        %s101 = scalar_lea.vmem [#allocation4], %s100
        %s102 = smul.u32 %s22, 8
        loop: start=0, step=1, limit=8
        $region25: #{tpu_custom_call.1} parent=23 // loop_pre_header
          _
        $region26: #{tpu_custom_call.1} parent=23 // loop_header
          %s104 = sphi 0, %s108
          %p105 = scmp.ge.s32.totalorder %s104, 8
        $region27: #{tpu_custom_call.1} parent=23 // loop_header_branch
          %107 = sbr.rel (%p105) target = $region31
        $region28: #{tpu_custom_call.1} parent=23 // loop_body
          %s109 = sadd.s32 %s102, %s104
          %s110 = sld [smem:[#allocation3 + %s109]]
          %p111 = scmp.gt.s32.totalorder %s110, 0
          %s112 = scalar_select %p111, %s110, 0
          %p113 = scmp.lt.s32.totalorder %s112, 63
          %s114 = scalar_select %p113, %s112, 63
          %s115 = scalar_lea.vmem %s1, %s114
          %v116 = vld [vmem:[%s115] sm:$0x1]
          %v117 = vmul.f32 %v116, 5.656854
          %s118 = scalar_lea.vmem %s101, %s104 [#allocation4]
          %vm119 = vcmask 253952
          %120 = vst.msk [vmem:[%s118] sm:$0x1] %vm119, %v117
        $region29: #{tpu_custom_call.1} parent=23 // loop_footer
          %s108 = sadd.s32 1, %s104
        $region30: #{tpu_custom_call.1} parent=23 // loop_footer_branch
          %103 = sbr.rel target = $region26
        $region31: #{tpu_custom_call.1} parent=23 // loop_exit
          _
        %s121 = sand.u32 %s51, 1
        %s122 = scalar_lea.sflag [#allocation5], %s121
        %s123 = sand.u32 %s51, 1
        %s124 = smul.addr %s123, 8
        %s125 = scalar_lea.vmem [#allocation4], %s124
        // Predicated region
        $region32: #{tpu_custom_call.1} parent=23 // pred_check
          %p126 = pneg %p61
        $region33: #{tpu_custom_call.1} parent=23 // pred_check_branch
          %128 = sbr.rel (%p126) target = $region35
        $region34: #{tpu_custom_call.1} parent=23 // pred_region
          %s130 = ssub.s32 128, 128
          %131 = vsyncadd %s122, %s130
          %s132 = smul.addr %s22, 128
          %s133 = scalar_lea.hbm %s2, %s132
          %s135 = sshll.u32 %s125, 4
          %s136 = int_to_ptr.vmem [resolvable:$true] %s135
          %138 = dma.vmem_to_hbm [thread:$0]  %s136, 128, %s133, %s122
        $region35: #{tpu_custom_call.1} parent=23 // pred_fallthru
          _
      $region24: #{tpu_custom_call.1} parent=5 // pred_fallthru
        _
      %p139 = scmp.le.s32.totalorder 2, %s17
      // Predicated region
      $region36: #{tpu_custom_call.1} parent=5 // pred_check
        %p140 = pneg %p139
      $region37: #{tpu_custom_call.1} parent=5 // pred_check_branch
        %142 = sbr.rel (%p140) target = $region39
      $region38: #{tpu_custom_call.1} parent=5 // pred_region
        %s143 = ssub.s32 %s17, 2
        // Predicated region
        $region40: #{tpu_custom_call.1} parent=38 // pred_check
          %p144 = pneg %p67
        $region41: #{tpu_custom_call.1} parent=38 // pred_check_branch
          %146 = sbr.rel (%p144) target = $region43
        $region42: #{tpu_custom_call.1} parent=38 // pred_region
          %s147 = sand.u32 %s52, 1
          %s148 = scalar_lea.sflag [#allocation5], %s147
          %s149 = sand.u32 %s52, 1
          %s150 = smul.addr %s149, 8
          %s151 = scalar_lea.vmem [#allocation4], %s150
          %152 = dma.done %s148, 128
        $region43: #{tpu_custom_call.1} parent=38 // pred_fallthru
          _
      $region39: #{tpu_custom_call.1} parent=5 // pred_fallthru
        _
    $region6: #{tpu_custom_call.1} parent=1 // loop_footer
      %s21 = sadd.s32 1, %s17
    $region7: #{tpu_custom_call.1} parent=1 // loop_footer_branch
      %16 = sbr.rel target = $region3
    $region8: #{tpu_custom_call.1} parent=1 // loop_exit
      _
    %153 = vsyncpa [#allocation5], 1
    %s154 = scalar_lea.sflag [#allocation5], 1
    %155 = vsyncpa %s154, 1

</llo_original>
